<compile_context>
chip_gen: v5e
topology: v5e:2x2
jax: 0.10.0
libtpu: 0.0.40
codegen_flags: <defaults>
</compile_context>

<pallas_src>
import functools

import jax
import jax.numpy as jnp
from jax.experimental import pallas as pl
from jax.experimental.pallas import tpu as pltpu


def _supcon_kernel(feat_ref, etf_ref, lab_ref, out_ref, *, inv_temp):
    """One batch tile, classes-on-sublanes / batch-on-lanes orientation.

    feat_ref : [TILE_B, D]  raw features
    etf_ref  : [C, D]       pre-L2-normalized class anchors, bf16
    lab_ref  : [1, TILE_B]  int32 class index per sample (lane-major)
    out_ref  : [1, TILE_B]  per-sample log_prob at the label (lane-dense)
    """
    feat = feat_ref[...].astype(jnp.float32)              # [TB, D]

    # F.normalize(p=2, dim=1): x * rsqrt(max(sum x^2, eps^2)); rsqrt -> EUP.
    sumsq = jnp.sum(feat * feat, axis=1, keepdims=True)   # [TB, 1]
    feat_n = feat * jax.lax.rsqrt(jnp.maximum(sumsq, jnp.float32(1e-24)))

    # bf16 MXU operands, f32 accumulation. 'cd,bd->cb' puts classes on the
    # sublane axis and the batch on the lane axis, so every later reduction
    # (over classes) produces a dense [1, TB] lane-major row. 1/T folded in as
    # a compile-time constant multiply.
    sim = jax.lax.dot_general(
        etf_ref[...], feat_n.astype(jnp.bfloat16),
        dimension_numbers=(((1,), (1,)), ((), ())),
        preferred_element_type=jnp.float32) * inv_temp    # [C, TB]

    c, tb = sim.shape
    logits_max = jnp.max(sim, axis=0, keepdims=True)                        # [1, TB]
    lse = jnp.log(jnp.sum(jnp.exp(sim - logits_max), axis=0, keepdims=True))  # [1, TB]

    # One-hot selection of the label row. Labels are single class indices, so
    # sum(mask, axis=0) == 1 exactly -> the divide from the reference is
    # dropped, and log_prob is never materialized:
    #   sum(mask * log_prob) = sum(mask * sim) - logits_max - lse.
    row_ids = jax.lax.broadcasted_iota(jnp.int32, (c, tb), 0)
    mask = (row_ids == lab_ref[...]).astype(jnp.float32)                     # [C, TB]
    picked = jnp.sum(mask * sim, axis=0, keepdims=True)                      # [1, TB]

    out_ref[...] = picked - logits_max - lse


def supcon_loss(features, etf_targets, labels, *, temperature=0.07,
                base_temperature=0.07, tile_b=512):
    """features: [B, D] float, etf_targets: [C, D] float, labels: [B] int."""
    b, d = features.shape
    c = etf_targets.shape[0]

    # The ETF prototypes are fixed class anchors: L2-normalize once in the
    # wrapper and hand the kernel a bf16 copy (MXU-native dtype, halves the
    # resident anchor VMEM and its HBM->VMEM DMA).
    etf_n = etf_targets.astype(jnp.float32)
    etf_n = etf_n / jnp.maximum(
        jnp.sqrt(jnp.sum(etf_n * etf_n, axis=1, keepdims=True)),
        jnp.float32(1e-12))
    etf_bf16 = etf_n.astype(jnp.bfloat16)                 # [C, D]

    # Batch tiling. Small batches: a single tile (lane dim == full array dim).
    # Larger batches: a 128-aligned tile, capped so there are >= 2 grid steps
    # and the "parallel" axis can shard across both v7x TensorCores.
    if b <= tile_b and b <= 256:
        tile_b = max(8, ((b + 7) // 8) * 8)
    else:
        tile_b = max(128, (min(tile_b, b) // 128) * 128)
        if b > 256:
            tile_b = min(tile_b, max(128, ((b // 2) // 128) * 128))
    b_pad = pl.cdiv(b, tile_b) * tile_b

    if b_pad != b:
        features = jnp.pad(features, ((0, b_pad - b), (0, 0)))
        labels = jnp.pad(labels, (0, b_pad - b))
    labels_row = labels.astype(jnp.int32).reshape(1, b_pad)

    # VMEM budget: double-buffered feature tile + label/output rows + the
    # (effectively resident, still double-buffered) bf16 anchor block.
    feat_tile_bytes = tile_b * d * features.dtype.itemsize
    etf_bytes = c * d * 2
    row_bytes = tile_b * 4
    need = 2 * (feat_tile_bytes + etf_bytes + 2 * row_bytes) + (1 << 20)
    vmem_limit = int(min(100 * 2**20, max(32 * 2**20, 2 * need)))
    # TODO(synk): for very large D*C on v7x (64 MiB VMEM), stream the class
    # axis with an online softmax instead of holding the full anchor block;
    # for small-C mem-bound configs, also cast features to bf16 at the
    # pallas_call boundary to halve the feature DMA bytes.

    kernel = functools.partial(
        _supcon_kernel, inv_temp=float(1.0 / temperature))

    mlpp = pl.pallas_call(
        kernel,
        out_shape=jax.ShapeDtypeStruct((1, b_pad), jnp.float32),
        grid=(b_pad // tile_b,),
        in_specs=[
            pl.BlockSpec((tile_b, d), lambda i: (i, 0)),   # feature tile
            pl.BlockSpec((c, d), lambda i: (0, 0)),        # anchors (resident)
            pl.BlockSpec((1, tile_b), lambda i: (0, i)),   # labels, lane-major
        ],
        out_specs=pl.BlockSpec((1, tile_b), lambda i: (0, i)),  # lane-dense
        compiler_params=pltpu.CompilerParams(
            dimension_semantics=("parallel",),
            vmem_limit_bytes=vmem_limit),
    )(features, etf_bf16, labels_row)

    # Fold -(T / base_T) into one scalar multiply on the final mean; padded
    # lanes are sliced off before the mean.
    return -(temperature / base_temperature) * jnp.mean(mlpp[0, :b])


def _reference(features, etf_targets, labels, temperature=0.07,
               base_temperature=0.07):
    eps = 1e-12
    f = features / jnp.maximum(
        jnp.linalg.norm(features, axis=1, keepdims=True), eps)
    t = etf_targets / jnp.maximum(
        jnp.linalg.norm(etf_targets, axis=1, keepdims=True), eps)
    sim = (f @ t.T) / temperature
    logits = sim - jnp.max(sim, axis=1, keepdims=True)
    log_prob = logits - jnp.log(jnp.sum(jnp.exp(logits), axis=1, keepdims=True))
    mask = jax.nn.one_hot(labels, etf_targets.shape[0], dtype=jnp.float32)
    mlpp = jnp.sum(mask * log_prob, axis=1) / jnp.sum(mask, axis=1)
    return jnp.mean(-(temperature / base_temperature) * mlpp)


if __name__ == "__main__":
    key = jax.random.PRNGKey(0)
    k1, k2, k3 = jax.random.split(key, 3)

    batch, dim, num_classes = 8, 32, 10
    features = jax.random.normal(k1, (batch, dim), dtype=jnp.float32)
    etf_targets = jax.random.normal(k2, (num_classes, dim), dtype=jnp.float32)
    labels = jax.random.randint(k3, (batch,), 0, num_classes, dtype=jnp.int32)

    loss = supcon_loss(features, etf_targets, labels)
    jax.block_until_ready(loss)

    ref = _reference(features, etf_targets, labels)
    # bf16 MXU operands -> cosine sims carry ~bf16 precision before the 1/T
    # (~14x) scaling; tolerance relaxed accordingly vs the pure-f32 reference.
    assert jnp.allclose(loss, ref, rtol=5e-2, atol=5e-2), (loss, ref)
    print("KERNEL_OK")
</pallas_src>

<mosaic_0001>
module attributes {stable_mosaic.version = 11 : i64} {
  func.func @_supcon_kernel(%arg0: i32, %arg1: memref<8x32xf32, #tpu.memory_space<vmem>>, %arg2: memref<10x32xbf16, #tpu.memory_space<vmem>>, %arg3: memref<1x8xi32, #tpu.memory_space<vmem>>, %arg4: memref<1x8xf32, #tpu.memory_space<vmem>>) attributes {dimension_semantics = [#tpu.dimension_semantics<parallel>], iteration_bounds = array<i64: 1>, scalar_prefetch = 0 : i64, scratch_operands = 0 : i64, tpu.core_type = #tpu.core_type<tc>, window_params = [{transform_indices = @transform_0, window_bounds = array<i64: 8, 32>}, {pipeline_mode = #tpu.pipeline_mode<synchronous>, transform_indices = @transform_1, window_bounds = array<i64: 10, 32>}, {transform_indices = @transform_2, window_bounds = array<i64: 1, 8>}, {transform_indices = @transform_3, window_bounds = array<i64: 1, 8>}]} {
    %c0 = arith.constant 0 : index
    %c0_0 = arith.constant 0 : index
    %0 = vector.load %arg1[%c0, %c0_0] : memref<8x32xf32, #tpu.memory_space<vmem>>, vector<8x32xf32>
    %1 = arith.mulf %0, %0 : vector<8x32xf32>
    %cst = arith.constant dense<0.000000e+00> : vector<8xf32>
    %2 = vector.multi_reduction <add>, %1, %cst [1] : vector<8x32xf32> to vector<8xf32>
    %3 = vector.shape_cast %2 : vector<8xf32> to vector<8x1xf32>
    %cst_1 = arith.constant 1.000000e-24 : f32
    %4 = vector.broadcast %cst_1 : f32 to vector<8x1xf32>
    %5 = arith.maximumf %3, %4 : vector<8x1xf32>
    %6 = math.rsqrt %5 : vector<8x1xf32>
    %7 = vector.broadcast %6 : vector<8x1xf32> to vector<8x32xf32>
    %8 = arith.mulf %0, %7 : vector<8x32xf32>
    %c0_2 = arith.constant 0 : index
    %c0_3 = arith.constant 0 : index
    %9 = vector.load %arg2[%c0_2, %c0_3] : memref<10x32xbf16, #tpu.memory_space<vmem>>, vector<10x32xbf16>
    %10 = arith.truncf %8 : vector<8x32xf32> to vector<8x32xbf16>
    %cst_4 = arith.constant dense<0.000000e+00> : vector<10x8xf32>
    %11 = tpu.matmul %9, %10, %cst_4 {dimension_numbers = #tpu.dot_dimension_numbers<[1], [1], [0], [0], [0, 0, 1, 0], [], []>} : vector<10x32xbf16>, vector<8x32xbf16>, vector<10x8xf32> -> vector<10x8xf32>
    %cst_5 = arith.constant 14.2857141 : f32
    %12 = vector.broadcast %cst_5 : f32 to vector<10x8xf32>
    %13 = arith.mulf %11, %12 : vector<10x8xf32>
    %cst_6 = arith.constant dense<0xFF800000> : vector<8xf32>
    %14 = vector.multi_reduction <maximumf>, %13, %cst_6 [0] : vector<10x8xf32> to vector<8xf32>
    %15 = vector.shape_cast %14 : vector<8xf32> to vector<1x8xf32>
    %16 = vector.broadcast %15 : vector<1x8xf32> to vector<10x8xf32>
    %17 = arith.subf %13, %16 : vector<10x8xf32>
    %18 = math.exp %17 : vector<10x8xf32>
    %cst_7 = arith.constant dense<0.000000e+00> : vector<8xf32>
    %19 = vector.multi_reduction <add>, %18, %cst_7 [0] : vector<10x8xf32> to vector<8xf32>
    %20 = vector.shape_cast %19 : vector<8xf32> to vector<1x8xf32>
    %21 = math.log %20 : vector<1x8xf32>
    %22 = tpu.iota {dimensions = array<i32: 0>} : vector<10x8xi32>
    %c0_8 = arith.constant 0 : index
    %c0_9 = arith.constant 0 : index
    %23 = vector.load %arg3[%c0_8, %c0_9] : memref<1x8xi32, #tpu.memory_space<vmem>>, vector<1x8xi32>
    %24 = vector.broadcast %23 : vector<1x8xi32> to vector<10x8xi32>
    %25 = arith.cmpi eq, %22, %24 : vector<10x8xi32>
    %26 = arith.extui %25 : vector<10x8xi1> to vector<10x8xi32>
    %27 = arith.sitofp %26 : vector<10x8xi32> to vector<10x8xf32>
    %28 = arith.mulf %27, %13 : vector<10x8xf32>
    %cst_10 = arith.constant dense<0.000000e+00> : vector<8xf32>
    %29 = vector.multi_reduction <add>, %28, %cst_10 [0] : vector<10x8xf32> to vector<8xf32>
    %30 = vector.shape_cast %29 : vector<8xf32> to vector<1x8xf32>
    %31 = arith.subf %30, %15 : vector<1x8xf32>
    %32 = arith.subf %31, %21 : vector<1x8xf32>
    %c0_11 = arith.constant 0 : index
    %c0_12 = arith.constant 0 : index
    %33 = vector.load %arg4[%c0_11, %c0_12] : memref<1x8xf32, #tpu.memory_space<vmem>>, vector<1x8xf32>
    tpu.vector_store %arg4[%c0_11, %c0_12], %32 {strides = array<i32>} : memref<1x8xf32, #tpu.memory_space<vmem>>, vector<1x8xf32>,
    return
  }
  func.func @transform_0(%arg0: i32) -> (i32, i32) {
    %c0_i32 = arith.constant 0 : i32
    %c0_i32_0 = arith.constant 0 : i32
    return %arg0, %c0_i32 : i32, i32
  }
  func.func @transform_1(%arg0: i32) -> (i32, i32) {
    %c0_i32 = arith.constant 0 : i32
    %c0_i32_0 = arith.constant 0 : i32
    %c0_i32_1 = arith.constant 0 : i32
    return %c0_i32, %c0_i32_0 : i32, i32
  }
  func.func @transform_2(%arg0: i32) -> (i32, i32) {
    %c0_i32 = arith.constant 0 : i32
    %c0_i32_0 = arith.constant 0 : i32
    return %c0_i32, %arg0 : i32, i32
  }
  func.func @transform_3(%arg0: i32) -> (i32, i32) {
    %c0_i32 = arith.constant 0 : i32
    %c0_i32_0 = arith.constant 0 : i32
    return %c0_i32, %arg0 : i32, i32
  }
}

</mosaic_0001>

<llo_original>
// kernel: tpu_custom_call.1
$region0: #{tpu_custom_call.1}
  #allocation0 [shape = 'u32[]', space=smem, size = 0x4, offset = 0x4, fixed_abs, tag = 'smem constant byte address 0x4 - core index']
  #allocation1 [shape = 'u32[72,128]{1,0:T(1,128)}', space=vmem, size = 0x9000, scoped, tag = 'internal scratch']
  %s0 = inlined_call_operand.hbm [shape: f32[8,32], index: 0, kind: input, shape index: {}]
  %s1 = inlined_call_operand.hbm [shape: bf16[10,32], index: 1, kind: input, shape index: {}]
  %s2 = inlined_call_operand.vmem [shape: s32[1,8], index: 2, kind: input, shape index: {}]
  %s3 = inlined_call_operand.hbm [shape: f32[1,8], index: 3, kind: output, shape index: {}]
  %s4 = sld [smem:[#allocation0]]
  $region30: #{tpu_custom_call.1} parent=0
    _
  %s6 = ssub.s32 1, %s4
  %s7 = scalar_select 0, %s6, %s4
  $region1: #{tpu_custom_call.1} parent=0
    #allocation2 [shape = 'u8[4096]{0}', space=vmem, size = 0x1000, scoped, tag = 'input window, operand 0, single buffered']
    #allocation3 [shape = 's32[1]{0}', space=sflag, size = 0x4, scoped, tag = 'scoped memory for tpu_custom_call.1']
    #allocation4 [shape = 's32[1]{0}', space=sflag, size = 0x4, scoped, tag = 'scoped memory for tpu_custom_call.1']
    #allocation5 [shape = 'u8[4096]{0}', space=vmem, size = 0x1000, scoped, tag = 'input window, operand 1, single buffered']
    #allocation6 [shape = 's32[1]{0}', space=sflag, size = 0x4, scoped, tag = 'scoped memory for tpu_custom_call.1']
    #allocation7 [shape = 'u8[512]{0}', space=vmem, size = 0x400, scoped, tag = 'output window, operand 0, single buffered']
    %8 = vsyncpa [#allocation3], 0
    %9 = vsyncpa [#allocation6], 0
    %10 = vsyncpa [#allocation4], 0
    // Predicated region
    $region2: #{tpu_custom_call.1} parent=1 // pred_check
      _
    $region3: #{tpu_custom_call.1} parent=1 // pred_check_branch
      %12 = sbr.rel (0) target = $region5
    $region4: #{tpu_custom_call.1} parent=1 // pred_region
      %14 = vsyncadd [#allocation3], 0
      %s16 = sshll.u32 %s0, 4
      %s17 = int_to_ptr.hbm [resolvable:$true] %s16
      %s18 = sshll.u32 [#allocation2], 4
      %s19 = int_to_ptr.vmem [resolvable:$true] %s18
      %21 = dma.hbm_to_vmem [thread:$0]  %s17, 128, %s19, [#allocation3]
    $region5: #{tpu_custom_call.1} parent=1 // pred_fallthru
      _
    // Predicated region
    $region6: #{tpu_custom_call.1} parent=1 // pred_check
      _
    $region7: #{tpu_custom_call.1} parent=1 // pred_check_branch
      %23 = sbr.rel (0) target = $region9
    $region8: #{tpu_custom_call.1} parent=1 // pred_region
      %25 = vsyncadd [#allocation6], 0
      %s26 = sshll.u32 %s1, 4
      %s27 = int_to_ptr.hbm [resolvable:$true] %s26
      %s28 = sshll.u32 [#allocation5], 4
      %s29 = int_to_ptr.vmem [resolvable:$true] %s28
      %34 = dma.hbm_to_vmem [thread:$0]  %s27, 128, %s29, [#allocation6], 64, 64, 4
    $region9: #{tpu_custom_call.1} parent=1 // pred_fallthru
      _
    // Predicated region
    $region10: #{tpu_custom_call.1} parent=1 // pred_check
      _
    $region11: #{tpu_custom_call.1} parent=1 // pred_check_branch
      %36 = sbr.rel (0) target = $region13
    $region12: #{tpu_custom_call.1} parent=1 // pred_region
      _
    $region13: #{tpu_custom_call.1} parent=1 // pred_fallthru
      _
    // Predicated region
    $region14: #{tpu_custom_call.1} parent=1 // pred_check
      _
    $region15: #{tpu_custom_call.1} parent=1 // pred_check_branch
      %38 = sbr.rel (0) target = $region17
    $region16: #{tpu_custom_call.1} parent=1 // pred_region
      %40 = dma.done [#allocation3], 128
    $region17: #{tpu_custom_call.1} parent=1 // pred_fallthru
      _
    // Predicated region
    $region18: #{tpu_custom_call.1} parent=1 // pred_check
      _
    $region19: #{tpu_custom_call.1} parent=1 // pred_check_branch
      %42 = sbr.rel (0) target = $region21
    $region20: #{tpu_custom_call.1} parent=1 // pred_region
      %44 = dma.done [#allocation6], 128
    $region21: #{tpu_custom_call.1} parent=1 // pred_fallthru
      _
    %v46 = vld [vmem:[#allocation2] sm:$0xff]
    %v47 = vmul.f32 %v46, %v46
    %vm48 = vcmask 261120
    %v49 = vsel %vm48, %v47, 0.0
    %50 = vadd.xlane.f32.xlu0 %v49
    %v51 = vpop.xlane.xlu0 %50
    %v52 = vmax.f32 %v51, 1e-24
    %v53 = vrsqrt.pop %v52
    %v54 = vmul.f32 %v53, %v52
    %v55 = vmul.f32 %v54, %v53
    %v56 = vmul.f32 0.5, %v55
    %v57 = vsub.f32 1.5, %v56
    %v58 = vmul.f32 %v53, %v57
    %vm59 = vweird.f32 %v52
    %vm60 = vweird.f32 %v53
    %vm61 = vmor %vm59, %vm60
    %v62 = vsel %vm61, %v53, %v58
    %v63 = vmul.f32 %v46, %v62
    %v64 = vld [vmem:[#allocation5] sm:$0xf]
    %v65 = vld [vmem:[#allocation5 + $0x4] sm:$0x1]
    %v66 = vpack.c.bf16 %v63, %v63
    %v69 = vunpack.c.l.b16 %v64
    %v70 = vunpack.c.l.b16 %v65
    %v71 = vpack.c.b16 %v70, %v69
    %v73 = vsel %vm48, %v71, 0
    %v76 = vsel %vm48, %v66, 0
    %78 = vmatpush.bf16.xpose.msra.mxu0 0
    %79 = vmatpush.bf16.xpose.msra.mxu0 0
    %80 = vmatpush.bf16.xpose.msra.mxu0 0
    %81 = vmatpush.bf16.xpose.msra.mxu0 0
    %82 = vmatpush.bf16.xpose.msra.mxu0 0
    %83 = vmatpush.bf16.xpose.msra.mxu0 0
    %84 = vmatpush.bf16.xpose.msra.mxu0 0
    %85 = vmatpush.bf16.xpose.msra.mxu0 %v76
    %86 = vmatmul.bf16.gmra.mxu0 %v73
    %v87 = vpop.f32.mrf.mxu0
    %v88 = vadd.f32 0.0, %v87
    %v89 = vpop.f32.mrf.mxu0
    %v90 = vadd.f32 0.0, %v89
    %91 = vdwg.mxu0
    %v92 = vmul.f32 %v88, 14.285714
    %v93 = vmul.f32 %v90, 14.285714
    %vm94 = vcmask 64512
    %v95 = vsel %vm94, %v92, -inf
    %vm96 = vcmask 58368
    %v97 = vsel %vm96, %v93, -inf
    %v98 = vmax.f32 %v95, %v97
    %v99 = vrot.slane %v98, 4
    %v100 = vmax.f32 %v98, %v99
    %v101 = vrot.slane %v100, 2
    %v102 = vmax.f32 %v100, %v101
    %v103 = vrot.slane %v102, 1
    %v104 = vmax.f32 %v102, %v103
    %v105 = vsub.f32 %v92, %v104
    %v106 = vsub.f32 %v93, %v104
    %v107 = vmul.f32 %v105, 1.442695
    %v108 = vpow.pop %v107
    %v109 = vmul.f32 %v106, 1.442695
    %v110 = vpow.pop %v109
    %v111 = vsel %vm94, %v108, 0.0
    %v112 = vsel %vm96, %v110, 0.0
    %v113 = vadd.f32 %v111, %v112
    %v114 = vrot.slane %v113, 4
    %v115 = vadd.f32 %v113, %v114
    %v116 = vrot.slane %v115, 2
    %v117 = vadd.f32 %v115, %v116
    %v118 = vrot.slane %v117, 1
    %v119 = vadd.f32 %v117, %v118
    %v120 = vlog2.pop %v119
    %v121 = vmul.f32 %v120, 0.6931472
    %v122 = vlaneseq
    %v123 = vshrl.u32 %v122, 7
    %v124 = vadd.s32 %v123, 8
    %v125 = vld [vmem:[%s2] sm:$0x1]
    %v126 = vperm.slane %v125, 0
    %vm127 = vcmp.eq.s32.totalorder %v123, %v126
    %vm128 = vcmp.eq.s32.totalorder %v124, %v126
    %v129 = vsel %vm127, 1, 0
    %v130 = vsel %vm128, 1, 0
    %v131 = vcvt.s32.f32 %v129
    %v132 = vcvt.s32.f32 %v130
    %v133 = vmul.f32 %v131, %v92
    %v134 = vmul.f32 %v132, %v93
    %v135 = vsel %vm94, %v133, 0.0
    %v136 = vsel %vm96, %v134, 0.0
    %v137 = vadd.f32 %v135, %v136
    %v138 = vrot.slane %v137, 4
    %v139 = vadd.f32 %v137, %v138
    %v140 = vrot.slane %v139, 2
    %v141 = vadd.f32 %v139, %v140
    %v142 = vrot.slane %v141, 1
    %v143 = vadd.f32 %v141, %v142
    %v144 = vsub.f32 %v143, %v104
    %v145 = vsub.f32 %v144, %v121
    %vm146 = vcmask 57344
    %147 = vst.msk [vmem:[#allocation7] sm:$0x1] %vm146, %v145
    // Predicated region
    $region22: #{tpu_custom_call.1} parent=1 // pred_check
      _
    $region23: #{tpu_custom_call.1} parent=1 // pred_check_branch
      %149 = sbr.rel (0) target = $region25
    $region24: #{tpu_custom_call.1} parent=1 // pred_region
      %151 = vsyncadd [#allocation4], 0
      %s153 = sshll.u32 [#allocation7], 4
      %s154 = int_to_ptr.vmem [resolvable:$true] %s153
      %s155 = sshll.u32 %s3, 4
      %s156 = int_to_ptr.hbm [resolvable:$true] %s155
      %158 = dma.vmem_to_hbm [thread:$0]  %s154, 16, %s156, [#allocation4]
    $region25: #{tpu_custom_call.1} parent=1 // pred_fallthru
      _
    // Predicated region
    $region26: #{tpu_custom_call.1} parent=1 // pred_check
      _
    $region27: #{tpu_custom_call.1} parent=1 // pred_check_branch
      %160 = sbr.rel (0) target = $region29
    $region28: #{tpu_custom_call.1} parent=1 // pred_region
      %162 = dma.done [#allocation4], 16
    $region29: #{tpu_custom_call.1} parent=1 // pred_fallthru
      _
    %163 = vsyncpa [#allocation3], 1
    %164 = vsyncpa [#allocation6], 1
    %165 = vsyncpa [#allocation4], 1

</llo_original>
